<compile_context>
chip_gen: v7x
topology: tpu7x:2x2x1
jax: 0.10.0
libtpu: 0.0.40
codegen_flags: <defaults>
</compile_context>

<pallas_src>
import math

import jax
import jax.numpy as jnp
from jax.experimental import pallas as pl
from jax.experimental.pallas import tpu as pltpu


def build_pe(max_len: int, d_model: int, dtype=jnp.float32) -> jnp.ndarray:
    """Mirrors PositionalEncoding.__init__; returns (max_len, 1, d_model)."""
    position = jnp.arange(max_len, dtype=jnp.float32)[:, None]      # (max_len, 1)
    pe = jnp.zeros((max_len, d_model), dtype=jnp.float32)
    sin_div = jnp.exp(
        jnp.arange(0, d_model, 2, dtype=jnp.float32) * (-math.log(10000.0) / d_model)
    )
    if d_model % 2 == 0:
        cos_div = sin_div
    else:
        cos_div = jnp.exp(
            jnp.arange(0, d_model - 1, 2, dtype=jnp.float32)
            * (-math.log(10000.0) / d_model)
        )
    pe = pe.at[:, 0::2].set(jnp.sin(position * sin_div))
    pe = pe.at[:, 1::2].set(jnp.cos(position * cos_div))
    return pe[:, None, :].astype(dtype)                              # (max_len, 1, d_model)


def _pe_add_kernel(x_ref, pe_ref, o_ref):
    # x_ref / o_ref: (tile_s, B, D) VMEM tiles; pe_ref: (tile_s, 1, D).
    # The batch broadcast is a size-1 sublane broadcast done on-chip and is
    # fully hidden under the HBM DMA of this bandwidth-bound add.
    o_ref[...] = (x_ref[...] + pe_ref[...]).astype(o_ref.dtype)


def _vmem_capacity_bytes() -> int:
    try:
        cap = getattr(pltpu.get_tpu_info(), "vmem_capacity_bytes", None)
        if cap:
            return int(cap)
    except Exception:
        pass
    return 64 * 1024 * 1024   # conservative (v7x-sized) default, safe on all gens


def positional_encoding_forward(
    x: jnp.ndarray,
    pe: jnp.ndarray,
    *,
    vmem_budget_bytes=None,              # total live-buffer budget (None -> ~VMEM/2)
    min_pallas_bytes: int = 64 * 1024,   # below this, plain XLA add
    min_lane_utilization: float = 0.25,  # below this (lane-sparse D), plain XLA add
) -> jnp.ndarray:
    """x: (S, B, D); pe: (max_len, 1, D). Returns x + pe[:S] broadcast over B."""
    S, B, D = x.shape
    dtype = x.dtype
    itemsize = jnp.dtype(dtype).itemsize

    pe_s = pe[:S].astype(dtype)          # (S, 1, D); per-call cast is only S*D elems

    # Layout / size guards: tiny inputs and lane-sparse d_model (e.g. the
    # module default d_model=10) are at least as fast as a fused XLA add.
    padded_D = pl.cdiv(D, 128) * 128
    if (x.size * itemsize < min_pallas_bytes) or (D / padded_D < min_lane_utilization):
        return x + pe_s

    # ---- Tile sizing with (8,128) VMEM padding accounted for -------------
    sublane = {4: 8, 2: 16, 1: 32}.get(itemsize, 8)
    padded_B = pl.cdiv(B, sublane) * sublane
    per_s_x = padded_B * padded_D * itemsize        # one s-slab of an x / out block
    per_s_pe = sublane * padded_D * itemsize        # pe block: singleton batch dim pads to a sublane group
    bytes_per_s = 4 * per_s_x + 2 * per_s_pe        # x + out double-buffered, pe double-buffered

    vmem_cap = _vmem_capacity_bytes()
    if vmem_budget_bytes is None:
        # ~half of chip VMEM for live buffers: ~5 MiB/buffer on v7x (64 MiB),
        # ~10 MiB/buffer on v5e/v6e (128 MiB).
        vmem_budget_bytes = max(6 * 1024 * 1024, vmem_cap // 2)

    tile_s = max(1, int(vmem_budget_bytes) // bytes_per_s)
    tile_s = min(tile_s, max(1, (vmem_cap - (8 << 20)) // bytes_per_s))  # never exceed physical VMEM
    tile_s = min(tile_s, S)
    # Give both v7x TensorCores work when the sequence is long enough
    # (no effect on v5e/v6e, which have a single TensorCore).
    if pl.cdiv(S, tile_s) < 2 and S >= 16:
        tile_s = pl.cdiv(S, 2)

    grid = (pl.cdiv(S, tile_s),)
    live_bytes = tile_s * bytes_per_s
    vmem_limit = min(vmem_cap, max(32 * 1024 * 1024, live_bytes + (8 << 20)))

    out = pl.pallas_call(
        _pe_add_kernel,
        out_shape=jax.ShapeDtypeStruct((S, B, D), dtype),
        grid=grid,
        in_specs=[
            pl.BlockSpec((tile_s, B, D), lambda i: (i, 0, 0)),
            pl.BlockSpec((tile_s, 1, D), lambda i: (i, 0, 0)),
        ],
        out_specs=pl.BlockSpec((tile_s, B, D), lambda i: (i, 0, 0)),
        compiler_params=pltpu.CompilerParams(
            dimension_semantics=("parallel",),   # shard seq tiles across v7x TCs
            vmem_limit_bytes=int(vmem_limit),
        ),
    )(x, pe_s)
    return out


if __name__ == "__main__":
    max_len = 5000
    key = jax.random.PRNGKey(0)
    k1, k2, k3 = jax.random.split(key, 3)

    # Case 1: module defaults (d_model=10) at a tiny shape -> XLA-fallback
    # path (lane-sparse + below size threshold), exact reference semantics.
    d1, S1, B1 = 10, 8, 2
    pe1 = build_pe(max_len, d1)
    x1 = jax.random.normal(k1, (S1, B1, d1), dtype=jnp.float32)
    out1 = jax.block_until_ready(positional_encoding_forward(x1, pe1))
    ref1 = x1 + pe1[:S1]
    assert out1.shape == x1.shape
    assert jnp.allclose(out1, ref1, atol=1e-6, rtol=1e-6)

    # Case 2: lane-dense d_model=128 through the tiled Pallas path.  A small
    # budget is passed to force several pipelined grid steps and a ragged
    # last tile at this modest demo size.
    d2, S2, B2 = 128, 300, 4
    pe2 = build_pe(max_len, d2)
    x2 = jax.random.normal(k2, (S2, B2, d2), dtype=jnp.float32)
    out2 = jax.block_until_ready(
        positional_encoding_forward(x2, pe2, vmem_budget_bytes=1 * 1024 * 1024)
    )
    ref2 = x2 + pe2[:S2]
    assert out2.shape == x2.shape
    assert jnp.allclose(out2, ref2, atol=1e-6, rtol=1e-6)

    # Case 3: bf16 activations with d_model=64 (half-dense lanes, still the
    # Pallas path); pe pre-built in bf16 once at "init" as recommended.
    # Exercises the >=2-grid-step split for a single-tile-sized input.
    d3, S3, B3 = 64, 128, 8
    pe3 = build_pe(max_len, d3, dtype=jnp.bfloat16)
    x3 = jax.random.normal(k3, (S3, B3, d3), dtype=jnp.bfloat16)
    out3 = jax.block_until_ready(positional_encoding_forward(x3, pe3))
    ref3 = x3 + pe3[:S3]
    assert out3.shape == x3.shape
    assert jnp.allclose(out3.astype(jnp.float32), ref3.astype(jnp.float32),
                        atol=1e-2, rtol=1e-2)

    print("KERNEL_OK")
</pallas_src>

<mosaic_0001>
module attributes {stable_mosaic.version = 11 : i64} {
  func.func @_pe_add_kernel(%arg0: i32, %arg1: memref<42x4x128xf32, #tpu.memory_space<vmem>>, %arg2: memref<42x1x128xf32, #tpu.memory_space<vmem>>, %arg3: memref<42x4x128xf32, #tpu.memory_space<vmem>>) attributes {dimension_semantics = [#tpu.dimension_semantics<parallel>], iteration_bounds = array<i64: 8>, scalar_prefetch = 0 : i64, scratch_operands = 0 : i64, tpu.core_type = #tpu.core_type<tc>, window_params = [{transform_indices = @transform_0, window_bounds = array<i64: 42, 4, 128>}, {transform_indices = @transform_1, window_bounds = array<i64: 42, 1, 128>}, {transform_indices = @transform_2, window_bounds = array<i64: 42, 4, 128>}]} {
    %c0 = arith.constant 0 : index
    %c0_0 = arith.constant 0 : index
    %c0_1 = arith.constant 0 : index
    %0 = vector.load %arg1[%c0, %c0_0, %c0_1] : memref<42x4x128xf32, #tpu.memory_space<vmem>>, vector<42x4x128xf32>
    %c0_2 = arith.constant 0 : index
    %c0_3 = arith.constant 0 : index
    %c0_4 = arith.constant 0 : index
    %1 = vector.load %arg2[%c0_2, %c0_3, %c0_4] : memref<42x1x128xf32, #tpu.memory_space<vmem>>, vector<42x1x128xf32>
    %2 = vector.broadcast %1 : vector<42x1x128xf32> to vector<42x4x128xf32>
    %3 = arith.addf %0, %2 : vector<42x4x128xf32>
    %c0_5 = arith.constant 0 : index
    %c0_6 = arith.constant 0 : index
    %c0_7 = arith.constant 0 : index
    %4 = vector.load %arg3[%c0_5, %c0_6, %c0_7] : memref<42x4x128xf32, #tpu.memory_space<vmem>>, vector<42x4x128xf32>
    tpu.vector_store %arg3[%c0_5, %c0_6, %c0_7], %3 {strides = array<i32>} : memref<42x4x128xf32, #tpu.memory_space<vmem>>, vector<42x4x128xf32>,
    return
  }
  func.func @transform_0(%arg0: i32) -> (i32, i32, i32) {
    %c0_i32 = arith.constant 0 : i32
    %c0_i32_0 = arith.constant 0 : i32
    %c0_i32_1 = arith.constant 0 : i32
    return %arg0, %c0_i32, %c0_i32_0 : i32, i32, i32
  }
  func.func @transform_1(%arg0: i32) -> (i32, i32, i32) {
    %c0_i32 = arith.constant 0 : i32
    %c0_i32_0 = arith.constant 0 : i32
    %c0_i32_1 = arith.constant 0 : i32
    return %arg0, %c0_i32, %c0_i32_0 : i32, i32, i32
  }
  func.func @transform_2(%arg0: i32) -> (i32, i32, i32) {
    %c0_i32 = arith.constant 0 : i32
    %c0_i32_0 = arith.constant 0 : i32
    %c0_i32_1 = arith.constant 0 : i32
    return %arg0, %c0_i32, %c0_i32_0 : i32, i32, i32
  }
}

</mosaic_0001>

<llo_original>
// kernel: tpu_custom_call.1
$region0: #{tpu_custom_call.1}
  #allocation0 [shape = 'u32[]', space=smem, size = 0x4, offset = 0x4, fixed_abs, tag = 'smem constant byte address 0x4 - core index']
  #allocation1 [shape = 'u32[144,128]{1,0:T(1,128)}', space=vmem, size = 0x12000, scoped, tag = 'internal scratch']
  %s0 = inlined_call_operand.hbm [shape: f32[300,4,128], index: 0, kind: input, shape index: {}]
  %s1 = inlined_call_operand.hbm [shape: f32[300,1,128], index: 1, kind: input, shape index: {}]
  %s2 = inlined_call_operand.hbm [shape: f32[300,4,128], index: 2, kind: output, shape index: {}]
  %s3 = sld [smem:[#allocation0]]
  $region49: #{tpu_custom_call.1} parent=0
    _
  %s5 = ssub.s32 1, %s3
  %s6 = scalar_select 0, %s5, %s3
  $region1: #{tpu_custom_call.1} parent=0
    #allocation2 [shape = 'u8[172032]{0}', space=vmem, size = 0x2a000, scoped, tag = 'input window, operand 0']
    #allocation3 [shape = 's32[2]{0}', space=sflag, size = 0x8, scoped, tag = 'scoped memory for tpu_custom_call.1']
    #allocation4 [shape = 's32[2]{0}', space=sflag, size = 0x8, scoped, tag = 'scoped memory for tpu_custom_call.1']
    #allocation5 [shape = 'u8[43008]{0}', space=vmem, size = 0xa800, scoped, tag = 'input window, operand 1']
    #allocation6 [shape = 's32[2]{0}', space=sflag, size = 0x8, scoped, tag = 'scoped memory for tpu_custom_call.1']
    #allocation7 [shape = 'u8[172032]{0}', space=vmem, size = 0x2a000, scoped, tag = 'output window, operand 0']
    %7 = vsyncpa [#allocation3], 0
    %s8 = scalar_lea.sflag [#allocation3], 1
    %9 = vsyncpa %s8, 0
    %10 = vsyncpa [#allocation6], 0
    %s11 = scalar_lea.sflag [#allocation6], 1
    %12 = vsyncpa %s11, 0
    %13 = vsyncpa [#allocation4], 0
    %s14 = scalar_lea.sflag [#allocation4], 1
    %15 = vsyncpa %s14, 0
    loop: start=0, step=1, limit=10
    $region2: #{tpu_custom_call.1} parent=1 // loop_pre_header
      _
    $region3: #{tpu_custom_call.1} parent=1 // loop_header
      %s17 = sphi 0, %s21
      %p18 = scmp.ge.s32.totalorder %s17, 10
      %s27 = sphi 0, %s29
      %s30 = sphi 0, %s27
      %s31 = sphi 0, %s30
      %s47 = sphi 0, %s31
      %s53 = sphi 0, %s55
      %s56 = sphi 0, %s53
      %s57 = sphi 0, %s56
      %s73 = sphi 0, %s57
      %s79 = sphi 0, %s81
      %s82 = sphi 0, %s79
      %s83 = sphi 0, %s82
      %s99 = sphi 0, %s83
    $region4: #{tpu_custom_call.1} parent=1 // loop_header_branch
      %20 = sbr.rel (%p18) target = $region8
    $region5: #{tpu_custom_call.1} parent=1 // loop_body
      %s22 = ssub.s32 %s17, 1
      %s23 = ssub.s32 %s17, 2
      %s24 = sadd.s32 %s17, 1
      %s25 = ssub.s32 %s17, %s24
      %p26 = scmp.eq.s32.totalorder %s25, 0
      %s28 = sadd.s32 %s27, 1
      %s29 = scalar_select %p26, %s27, %s28
      %p32 = pneg %p26
      %p33 = scmp.eq.s32.totalorder %s17, 7
      %p34 = por %p32, %p33
      %p35 = scmp.ne.s32.totalorder %s27, %s30
      %p36 = scmp.eq.s32.totalorder %s17, 0
      %p37 = por %p35, %p36
      %p38 = scmp.ne.s32.totalorder %s27, %s30
      %p39 = scmp.eq.s32.totalorder %s22, 7
      %p40 = por %p38, %p39
      %p41 = scmp.ne.s32.totalorder %s30, %s31
      %p42 = scmp.eq.s32.totalorder %s22, 0
      %p43 = por %p41, %p42
      %p44 = scmp.ne.s32.totalorder %s30, %s31
      %p45 = scmp.eq.s32.totalorder %s23, 7
      %p46 = por %p44, %p45
      %p48 = scmp.ne.s32.totalorder %s31, %s47
      %p49 = scmp.eq.s32.totalorder %s23, 0
      %p50 = por %p48, %p49
      %s51 = ssub.s32 %s17, %s24
      %p52 = scmp.eq.s32.totalorder %s51, 0
      %s54 = sadd.s32 %s53, 1
      %s55 = scalar_select %p52, %s53, %s54
      %p58 = pneg %p52
      %p59 = scmp.eq.s32.totalorder %s17, 7
      %p60 = por %p58, %p59
      %p61 = scmp.ne.s32.totalorder %s53, %s56
      %p62 = scmp.eq.s32.totalorder %s17, 0
      %p63 = por %p61, %p62
      %p64 = scmp.ne.s32.totalorder %s53, %s56
      %p65 = scmp.eq.s32.totalorder %s22, 7
      %p66 = por %p64, %p65
      %p67 = scmp.ne.s32.totalorder %s56, %s57
      %p68 = scmp.eq.s32.totalorder %s22, 0
      %p69 = por %p67, %p68
      %p70 = scmp.ne.s32.totalorder %s56, %s57
      %p71 = scmp.eq.s32.totalorder %s23, 7
      %p72 = por %p70, %p71
      %p74 = scmp.ne.s32.totalorder %s57, %s73
      %p75 = scmp.eq.s32.totalorder %s23, 0
      %p76 = por %p74, %p75
      %s77 = ssub.s32 %s17, %s24
      %p78 = scmp.eq.s32.totalorder %s77, 0
      %s80 = sadd.s32 %s79, 1
      %s81 = scalar_select %p78, %s79, %s80
      %p84 = pneg %p78
      %p85 = scmp.eq.s32.totalorder %s17, 7
      %p86 = por %p84, %p85
      %p87 = scmp.ne.s32.totalorder %s79, %s82
      %p88 = scmp.eq.s32.totalorder %s17, 0
      %p89 = por %p87, %p88
      %p90 = scmp.ne.s32.totalorder %s79, %s82
      %p91 = scmp.eq.s32.totalorder %s22, 7
      %p92 = por %p90, %p91
      %p93 = scmp.ne.s32.totalorder %s82, %s83
      %p94 = scmp.eq.s32.totalorder %s22, 0
      %p95 = por %p93, %p94
      %p96 = scmp.ne.s32.totalorder %s82, %s83
      %p97 = scmp.eq.s32.totalorder %s23, 7
      %p98 = por %p96, %p97
      %p100 = scmp.ne.s32.totalorder %s83, %s99
      %p101 = scmp.eq.s32.totalorder %s23, 0
      %p102 = por %p100, %p101
      %p103 = scmp.le.s32.totalorder 1, %s17
      %p104 = scmp.lt.s32.totalorder %s17, 9
      %p105 = pnand %p103, %p104
      %p106 = pneg %p105
      // Predicated region
      $region9: #{tpu_custom_call.1} parent=5 // pred_check
        _
      $region10: #{tpu_custom_call.1} parent=5 // pred_check_branch
        %108 = sbr.rel (%p105) target = $region12
      $region11: #{tpu_custom_call.1} parent=5 // pred_region
        %s109 = ssub.s32 %s17, 1
      $region12: #{tpu_custom_call.1} parent=5 // pred_fallthru
        _
      %p110 = scmp.lt.s32.totalorder %s17, 8
      // Predicated region
      $region13: #{tpu_custom_call.1} parent=5 // pred_check
        %p111 = pneg %p110
      $region14: #{tpu_custom_call.1} parent=5 // pred_check_branch
        %113 = sbr.rel (%p111) target = $region16
      $region15: #{tpu_custom_call.1} parent=5 // pred_region
        // Predicated region
        $region17: #{tpu_custom_call.1} parent=15 // pred_check
          %p114 = pneg %p37
        $region18: #{tpu_custom_call.1} parent=15 // pred_check_branch
          %116 = sbr.rel (%p114) target = $region20
        $region19: #{tpu_custom_call.1} parent=15 // pred_region
          %s117 = sand.u32 %s27, 1
          %s118 = scalar_lea.sflag [#allocation3], %s117
          %s119 = sand.u32 %s27, 1
          %s120 = smul.addr %s119, 168
          %s121 = scalar_lea.vmem [#allocation2], %s120
          %s122 = smul.u32 42, %s17
          %s123 = ssub.s32 300, %s122
          %p124 = scmp.lt.s32.totalorder %s123, 42
          %s125 = scalar_select %p124, %s123, 42
          %s126 = smul.u32 64, %s125
          %s128 = ssub.s32 2688, %s126
          %129 = vsyncadd %s118, %s128
          %p130 = scmp.ne.s32.totalorder 0, %s126
          %s131 = smul.addr %s122, 64
          %s132 = scalar_lea.hbm %s0, %s131
          %s133 = smul.u32 4, %s125
          %s134 = sshll.u32 %s121, 4
          %s135 = int_to_ptr.vmem [resolvable:$true] %s134
          %s136 = sshll.u32 %s133, 4
          %140 = dma.hbm_to_vmem [thread:$0]  (%p130), %s132, %s136, %s135, %s118, 64, 64, 4
        $region20: #{tpu_custom_call.1} parent=15 // pred_fallthru
          _
        // Predicated region
        $region21: #{tpu_custom_call.1} parent=15 // pred_check
          %p141 = pneg %p63
        $region22: #{tpu_custom_call.1} parent=15 // pred_check_branch
          %143 = sbr.rel (%p141) target = $region24
        $region23: #{tpu_custom_call.1} parent=15 // pred_region
          %s144 = sand.u32 %s53, 1
          %s145 = scalar_lea.sflag [#allocation6], %s144
          %s146 = sand.u32 %s53, 1
          %s147 = smul.addr %s146, 42
          %s148 = scalar_lea.vmem [#allocation5], %s147
          %s149 = smul.u32 42, %s17
          %s150 = ssub.s32 300, %s149
          %p151 = scmp.lt.s32.totalorder %s150, 42
          %s152 = scalar_select %p151, %s150, 42
          %s153 = smul.u32 16, %s152
          %s155 = ssub.s32 672, %s153
          %156 = vsyncadd %s145, %s155
          %p157 = scmp.ne.s32.totalorder 0, %s153
          %s158 = smul.addr %s149, 16
          %s159 = scalar_lea.hbm %s1, %s158
          %s160 = sshll.u32 %s148, 4
          %s161 = int_to_ptr.vmem [resolvable:$true] %s160
          %s162 = sshll.u32 %s152, 4
          %166 = dma.hbm_to_vmem [thread:$0]  (%p157), %s159, %s162, %s161, %s145, 16, 16, 1
        $region24: #{tpu_custom_call.1} parent=15 // pred_fallthru
          _
      $region16: #{tpu_custom_call.1} parent=5 // pred_fallthru
        _
      %p167 = scmp.le.s32.totalorder 1, %s17
      %p168 = scmp.lt.s32.totalorder %s17, 9
      %p169 = pnand %p167, %p168
      %p170 = pneg %p169
      // Predicated region
      $region25: #{tpu_custom_call.1} parent=5 // pred_check
        _
      $region26: #{tpu_custom_call.1} parent=5 // pred_check_branch
        %172 = sbr.rel (%p169) target = $region28
      $region27: #{tpu_custom_call.1} parent=5 // pred_region
        %s173 = ssub.s32 %s17, 1
        %s174 = sand.u32 %s30, 1
        %s175 = scalar_lea.sflag [#allocation3], %s174
        %s176 = sand.u32 %s30, 1
        %s177 = smul.addr %s176, 168
        %s178 = scalar_lea.vmem [#allocation2], %s177
        // Predicated region
        $region29: #{tpu_custom_call.1} parent=27 // pred_check
          %p179 = pneg %p43
        $region30: #{tpu_custom_call.1} parent=27 // pred_check_branch
          %181 = sbr.rel (%p179) target = $region32
        $region31: #{tpu_custom_call.1} parent=27 // pred_region
          %182 = dma.done %s175, 2688
        $region32: #{tpu_custom_call.1} parent=27 // pred_fallthru
          _
        %s183 = sand.u32 %s56, 1
        %s184 = scalar_lea.sflag [#allocation6], %s183
        %s185 = sand.u32 %s56, 1
        %s186 = smul.addr %s185, 42
        %s187 = scalar_lea.vmem [#allocation5], %s186
        // Predicated region
        $region33: #{tpu_custom_call.1} parent=27 // pred_check
          %p188 = pneg %p69
        $region34: #{tpu_custom_call.1} parent=27 // pred_check_branch
          %190 = sbr.rel (%p188) target = $region36
        $region35: #{tpu_custom_call.1} parent=27 // pred_region
          %191 = dma.done %s184, 672
        $region36: #{tpu_custom_call.1} parent=27 // pred_fallthru
          _
        %s192 = sand.u32 %s30, 1
        %s193 = scalar_lea.sflag [#allocation3], %s192
        %s194 = sand.u32 %s30, 1
        %s195 = smul.addr %s194, 168
        %s196 = scalar_lea.vmem [#allocation2], %s195
        %p197 = pneg %p43
        %p198 = pneg %p40
        %s199 = sand.u32 %s56, 1
        %s200 = scalar_lea.sflag [#allocation6], %s199
        %s201 = sand.u32 %s56, 1
        %s202 = smul.addr %s201, 42
        %s203 = scalar_lea.vmem [#allocation5], %s202
        %p204 = pneg %p69
        %p205 = pneg %p66
        %p206 = pneg %p95
        %p207 = pneg %p92
        %s208 = sand.u32 %s82, 1
        %s209 = scalar_lea.sflag [#allocation4], %s208
        %s210 = sand.u32 %s82, 1
        %s211 = smul.addr %s210, 168
        %s212 = scalar_lea.vmem [#allocation7], %s211
        %s213 = smul.u32 42, %s22
        %s214 = ssub.s32 300, %s213
        %p215 = scmp.lt.s32.totalorder %s214, 42
        %s216 = scalar_select %p215, %s214, 42
        %s217 = smul.u32 64, %s216
        %s218 = smul.u32 42, %s22
        %s219 = ssub.s32 300, %s218
        %p220 = scmp.lt.s32.totalorder %s219, 42
        %s221 = scalar_select %p220, %s219, 42
        %s222 = smul.u32 16, %s221
        %s223 = smul.u32 42, %s22
        %s224 = ssub.s32 300, %s223
        %p225 = scmp.lt.s32.totalorder %s224, 42
        %s226 = scalar_select %p225, %s224, 42
        %s227 = smul.u32 64, %s226
        %v228 = vld [vmem:[%s178] sm:$0xf]
        %v229 = vld [vmem:[%s178 + $0x4] sm:$0xf]
        %v230 = vld [vmem:[%s178 + $0x8] sm:$0xf]
        %v231 = vld [vmem:[%s178 + $0xc] sm:$0xf]
        %v232 = vld [vmem:[%s178 + $0x10] sm:$0xf]
        %v233 = vld [vmem:[%s178 + $0x14] sm:$0xf]
        %v234 = vld [vmem:[%s178 + $0x18] sm:$0xf]
        %v235 = vld [vmem:[%s178 + $0x1c] sm:$0xf]
        %v236 = vld [vmem:[%s178 + $0x20] sm:$0xf]
        %v237 = vld [vmem:[%s178 + $0x24] sm:$0xf]
        %v238 = vld [vmem:[%s178 + $0x28] sm:$0xf]
        %v239 = vld [vmem:[%s178 + $0x2c] sm:$0xf]
        %v240 = vld [vmem:[%s178 + $0x30] sm:$0xf]
        %v241 = vld [vmem:[%s178 + $0x34] sm:$0xf]
        %v242 = vld [vmem:[%s178 + $0x38] sm:$0xf]
        %v243 = vld [vmem:[%s178 + $0x3c] sm:$0xf]
        %v244 = vld [vmem:[%s178 + $0x40] sm:$0xf]
        %v245 = vld [vmem:[%s178 + $0x44] sm:$0xf]
        %v246 = vld [vmem:[%s178 + $0x48] sm:$0xf]
        %v247 = vld [vmem:[%s178 + $0x4c] sm:$0xf]
        %v248 = vld [vmem:[%s178 + $0x50] sm:$0xf]
        %v249 = vld [vmem:[%s178 + $0x54] sm:$0xf]
        %v250 = vld [vmem:[%s178 + $0x58] sm:$0xf]
        %v251 = vld [vmem:[%s178 + $0x5c] sm:$0xf]
        %v252 = vld [vmem:[%s178 + $0x60] sm:$0xf]
        %v253 = vld [vmem:[%s178 + $0x64] sm:$0xf]
        %v254 = vld [vmem:[%s178 + $0x68] sm:$0xf]
        %v255 = vld [vmem:[%s178 + $0x6c] sm:$0xf]
        %v256 = vld [vmem:[%s178 + $0x70] sm:$0xf]
        %v257 = vld [vmem:[%s178 + $0x74] sm:$0xf]
        %v258 = vld [vmem:[%s178 + $0x78] sm:$0xf]
        %v259 = vld [vmem:[%s178 + $0x7c] sm:$0xf]
        %v260 = vld [vmem:[%s178 + $0x80] sm:$0xf]
        %v261 = vld [vmem:[%s178 + $0x84] sm:$0xf]
        %v262 = vld [vmem:[%s178 + $0x88] sm:$0xf]
        %v263 = vld [vmem:[%s178 + $0x8c] sm:$0xf]
        %v264 = vld [vmem:[%s178 + $0x90] sm:$0xf]
        %v265 = vld [vmem:[%s178 + $0x94] sm:$0xf]
        %v266 = vld [vmem:[%s178 + $0x98] sm:$0xf]
        %v267 = vld [vmem:[%s178 + $0x9c] sm:$0xf]
        %v268 = vld [vmem:[%s178 + $0xa0] sm:$0xf]
        %v269 = vld [vmem:[%s178 + $0xa4] sm:$0xf]
        %v270 = vld [vmem:[%s187] sm:$0x1]
        %v271 = vld [vmem:[%s187 + $0x1] sm:$0x1]
        %v272 = vld [vmem:[%s187 + $0x2] sm:$0x1]
        %v273 = vld [vmem:[%s187 + $0x3] sm:$0x1]
        %v274 = vld [vmem:[%s187 + $0x4] sm:$0x1]
        %v275 = vld [vmem:[%s187 + $0x5] sm:$0x1]
        %v276 = vld [vmem:[%s187 + $0x6] sm:$0x1]
        %v277 = vld [vmem:[%s187 + $0x7] sm:$0x1]
        %v278 = vld [vmem:[%s187 + $0x8] sm:$0x1]
        %v279 = vld [vmem:[%s187 + $0x9] sm:$0x1]
        %v280 = vld [vmem:[%s187 + $0xa] sm:$0x1]
        %v281 = vld [vmem:[%s187 + $0xb] sm:$0x1]
        %v282 = vld [vmem:[%s187 + $0xc] sm:$0x1]
        %v283 = vld [vmem:[%s187 + $0xd] sm:$0x1]
        %v284 = vld [vmem:[%s187 + $0xe] sm:$0x1]
        %v285 = vld [vmem:[%s187 + $0xf] sm:$0x1]
        %v286 = vld [vmem:[%s187 + $0x10] sm:$0x1]
        %v287 = vld [vmem:[%s187 + $0x11] sm:$0x1]
        %v288 = vld [vmem:[%s187 + $0x12] sm:$0x1]
        %v289 = vld [vmem:[%s187 + $0x13] sm:$0x1]
        %v290 = vld [vmem:[%s187 + $0x14] sm:$0x1]
        %v291 = vld [vmem:[%s187 + $0x15] sm:$0x1]
        %v292 = vld [vmem:[%s187 + $0x16] sm:$0x1]
        %v293 = vld [vmem:[%s187 + $0x17] sm:$0x1]
        %v294 = vld [vmem:[%s187 + $0x18] sm:$0x1]
        %v295 = vld [vmem:[%s187 + $0x19] sm:$0x1]
        %v296 = vld [vmem:[%s187 + $0x1a] sm:$0x1]
        %v297 = vld [vmem:[%s187 + $0x1b] sm:$0x1]
        %v298 = vld [vmem:[%s187 + $0x1c] sm:$0x1]
        %v299 = vld [vmem:[%s187 + $0x1d] sm:$0x1]
        %v300 = vld [vmem:[%s187 + $0x1e] sm:$0x1]
        %v301 = vld [vmem:[%s187 + $0x1f] sm:$0x1]
        %v302 = vld [vmem:[%s187 + $0x20] sm:$0x1]
        %v303 = vld [vmem:[%s187 + $0x21] sm:$0x1]
        %v304 = vld [vmem:[%s187 + $0x22] sm:$0x1]
        %v305 = vld [vmem:[%s187 + $0x23] sm:$0x1]
        %v306 = vld [vmem:[%s187 + $0x24] sm:$0x1]
        %v307 = vld [vmem:[%s187 + $0x25] sm:$0x1]
        %v308 = vld [vmem:[%s187 + $0x26] sm:$0x1]
        %v309 = vld [vmem:[%s187 + $0x27] sm:$0x1]
        %v310 = vld [vmem:[%s187 + $0x28] sm:$0x1]
        %v311 = vld [vmem:[%s187 + $0x29] sm:$0x1]
        %v354 = vlaneseq
        %v355 = vshrl.u32 %v354, 7
        %v356 = vsub.s32 0, %v355
        %v357 = vrot.slane %v270, %v356
        %v358 = vlaneseq
        %v359 = vshrl.u32 %v358, 7
        %v360 = vsub.s32 0, %v359
        %v361 = vrot.slane %v271, %v360
        %v362 = vlaneseq
        %v363 = vshrl.u32 %v362, 7
        %v364 = vsub.s32 0, %v363
        %v365 = vrot.slane %v272, %v364
        %v366 = vlaneseq
        %v367 = vshrl.u32 %v366, 7
        %v368 = vsub.s32 0, %v367
        %v369 = vrot.slane %v273, %v368
        %v370 = vlaneseq
        %v371 = vshrl.u32 %v370, 7
        %v372 = vsub.s32 0, %v371
        %v373 = vrot.slane %v274, %v372
        %v374 = vlaneseq
        %v375 = vshrl.u32 %v374, 7
        %v376 = vsub.s32 0, %v375
        %v377 = vrot.slane %v275, %v376
        %v378 = vlaneseq
        %v379 = vshrl.u32 %v378, 7
        %v380 = vsub.s32 0, %v379
        %v381 = vrot.slane %v276, %v380
        %v382 = vlaneseq
        %v383 = vshrl.u32 %v382, 7
        %v384 = vsub.s32 0, %v383
        %v385 = vrot.slane %v277, %v384
        %v386 = vlaneseq
        %v387 = vshrl.u32 %v386, 7
        %v388 = vsub.s32 0, %v387
        %v389 = vrot.slane %v278, %v388
        %v390 = vlaneseq
        %v391 = vshrl.u32 %v390, 7
        %v392 = vsub.s32 0, %v391
        %v393 = vrot.slane %v279, %v392
        %v394 = vlaneseq
        %v395 = vshrl.u32 %v394, 7
        %v396 = vsub.s32 0, %v395
        %v397 = vrot.slane %v280, %v396
        %v398 = vlaneseq
        %v399 = vshrl.u32 %v398, 7
        %v400 = vsub.s32 0, %v399
        %v401 = vrot.slane %v281, %v400
        %v402 = vlaneseq
        %v403 = vshrl.u32 %v402, 7
        %v404 = vsub.s32 0, %v403
        %v405 = vrot.slane %v282, %v404
        %v406 = vlaneseq
        %v407 = vshrl.u32 %v406, 7
        %v408 = vsub.s32 0, %v407
        %v409 = vrot.slane %v283, %v408
        %v410 = vlaneseq
        %v411 = vshrl.u32 %v410, 7
        %v412 = vsub.s32 0, %v411
        %v413 = vrot.slane %v284, %v412
        %v414 = vlaneseq
        %v415 = vshrl.u32 %v414, 7
        %v416 = vsub.s32 0, %v415
        %v417 = vrot.slane %v285, %v416
        %v418 = vlaneseq
        %v419 = vshrl.u32 %v418, 7
        %v420 = vsub.s32 0, %v419
        %v421 = vrot.slane %v286, %v420
        %v422 = vlaneseq
        %v423 = vshrl.u32 %v422, 7
        %v424 = vsub.s32 0, %v423
        %v425 = vrot.slane %v287, %v424
        %v426 = vlaneseq
        %v427 = vshrl.u32 %v426, 7
        %v428 = vsub.s32 0, %v427
        %v429 = vrot.slane %v288, %v428
        %v430 = vlaneseq
        %v431 = vshrl.u32 %v430, 7
        %v432 = vsub.s32 0, %v431
        %v433 = vrot.slane %v289, %v432
        %v434 = vlaneseq
        %v435 = vshrl.u32 %v434, 7
        %v436 = vsub.s32 0, %v435
        %v437 = vrot.slane %v290, %v436
        %v438 = vlaneseq
        %v439 = vshrl.u32 %v438, 7
        %v440 = vsub.s32 0, %v439
        %v441 = vrot.slane %v291, %v440
        %v442 = vlaneseq
        %v443 = vshrl.u32 %v442, 7
        %v444 = vsub.s32 0, %v443
        %v445 = vrot.slane %v292, %v444
        %v446 = vlaneseq
        %v447 = vshrl.u32 %v446, 7
        %v448 = vsub.s32 0, %v447
        %v449 = vrot.slane %v293, %v448
        %v450 = vlaneseq
        %v451 = vshrl.u32 %v450, 7
        %v452 = vsub.s32 0, %v451
        %v453 = vrot.slane %v294, %v452
        %v454 = vlaneseq
        %v455 = vshrl.u32 %v454, 7
        %v456 = vsub.s32 0, %v455
        %v457 = vrot.slane %v295, %v456
        %v458 = vlaneseq
        %v459 = vshrl.u32 %v458, 7
        %v460 = vsub.s32 0, %v459
        %v461 = vrot.slane %v296, %v460
        %v462 = vlaneseq
        %v463 = vshrl.u32 %v462, 7
        %v464 = vsub.s32 0, %v463
        %v465 = vrot.slane %v297, %v464
        %v466 = vlaneseq
        %v467 = vshrl.u32 %v466, 7
        %v468 = vsub.s32 0, %v467
        %v469 = vrot.slane %v298, %v468
        %v470 = vlaneseq
        %v471 = vshrl.u32 %v470, 7
        %v472 = vsub.s32 0, %v471
        %v473 = vrot.slane %v299, %v472
        %v474 = vlaneseq
        %v475 = vshrl.u32 %v474, 7
        %v476 = vsub.s32 0, %v475
        %v477 = vrot.slane %v300, %v476
        %v478 = vlaneseq
        %v479 = vshrl.u32 %v478, 7
        %v480 = vsub.s32 0, %v479
        %v481 = vrot.slane %v301, %v480
        %v482 = vlaneseq
        %v483 = vshrl.u32 %v482, 7
        %v484 = vsub.s32 0, %v483
        %v485 = vrot.slane %v302, %v484
        %v486 = vlaneseq
        %v487 = vshrl.u32 %v486, 7
        %v488 = vsub.s32 0, %v487
        %v489 = vrot.slane %v303, %v488
        %v490 = vlaneseq
        %v491 = vshrl.u32 %v490, 7
        %v492 = vsub.s32 0, %v491
        %v493 = vrot.slane %v304, %v492
        %v494 = vlaneseq
        %v495 = vshrl.u32 %v494, 7
        %v496 = vsub.s32 0, %v495
        %v497 = vrot.slane %v305, %v496
        %v498 = vlaneseq
        %v499 = vshrl.u32 %v498, 7
        %v500 = vsub.s32 0, %v499
        %v501 = vrot.slane %v306, %v500
        %v502 = vlaneseq
        %v503 = vshrl.u32 %v502, 7
        %v504 = vsub.s32 0, %v503
        %v505 = vrot.slane %v307, %v504
        %v506 = vlaneseq
        %v507 = vshrl.u32 %v506, 7
        %v508 = vsub.s32 0, %v507
        %v509 = vrot.slane %v308, %v508
        %v510 = vlaneseq
        %v511 = vshrl.u32 %v510, 7
        %v512 = vsub.s32 0, %v511
        %v513 = vrot.slane %v309, %v512
        %v514 = vlaneseq
        %v515 = vshrl.u32 %v514, 7
        %v516 = vsub.s32 0, %v515
        %v517 = vrot.slane %v310, %v516
        %v518 = vlaneseq
        %v519 = vshrl.u32 %v518, 7
        %v520 = vsub.s32 0, %v519
        %v521 = vrot.slane %v311, %v520
        %v564 = vadd.f32 %v228, %v357
        %v565 = vadd.f32 %v229, %v361
        %v566 = vadd.f32 %v230, %v365
        %v567 = vadd.f32 %v231, %v369
        %v568 = vadd.f32 %v232, %v373
        %v569 = vadd.f32 %v233, %v377
        %v570 = vadd.f32 %v234, %v381
        %v571 = vadd.f32 %v235, %v385
        %v572 = vadd.f32 %v236, %v389
        %v573 = vadd.f32 %v237, %v393
        %v574 = vadd.f32 %v238, %v397
        %v575 = vadd.f32 %v239, %v401
        %v576 = vadd.f32 %v240, %v405
        %v577 = vadd.f32 %v241, %v409
        %v578 = vadd.f32 %v242, %v413
        %v579 = vadd.f32 %v243, %v417
        %v580 = vadd.f32 %v244, %v421
        %v581 = vadd.f32 %v245, %v425
        %v582 = vadd.f32 %v246, %v429
        %v583 = vadd.f32 %v247, %v433
        %v584 = vadd.f32 %v248, %v437
        %v585 = vadd.f32 %v249, %v441
        %v586 = vadd.f32 %v250, %v445
        %v587 = vadd.f32 %v251, %v449
        %v588 = vadd.f32 %v252, %v453
        %v589 = vadd.f32 %v253, %v457
        %v590 = vadd.f32 %v254, %v461
        %v591 = vadd.f32 %v255, %v465
        %v592 = vadd.f32 %v256, %v469
        %v593 = vadd.f32 %v257, %v473
        %v594 = vadd.f32 %v258, %v477
        %v595 = vadd.f32 %v259, %v481
        %v596 = vadd.f32 %v260, %v485
        %v597 = vadd.f32 %v261, %v489
        %v598 = vadd.f32 %v262, %v493
        %v599 = vadd.f32 %v263, %v497
        %v600 = vadd.f32 %v264, %v501
        %v601 = vadd.f32 %v265, %v505
        %v602 = vadd.f32 %v266, %v509
        %v603 = vadd.f32 %v267, %v513
        %v604 = vadd.f32 %v268, %v517
        %v605 = vadd.f32 %v269, %v521
        %606 = vst [vmem:[%s212] sm:$0xf] %v564
        %607 = vst [vmem:[%s212 + $0x4] sm:$0xf] %v565
        %608 = vst [vmem:[%s212 + $0x8] sm:$0xf] %v566
        %609 = vst [vmem:[%s212 + $0xc] sm:$0xf] %v567
        %610 = vst [vmem:[%s212 + $0x10] sm:$0xf] %v568
        %611 = vst [vmem:[%s212 + $0x14] sm:$0xf] %v569
        %612 = vst [vmem:[%s212 + $0x18] sm:$0xf] %v570
        %613 = vst [vmem:[%s212 + $0x1c] sm:$0xf] %v571
        %614 = vst [vmem:[%s212 + $0x20] sm:$0xf] %v572
        %615 = vst [vmem:[%s212 + $0x24] sm:$0xf] %v573
        %616 = vst [vmem:[%s212 + $0x28] sm:$0xf] %v574
        %617 = vst [vmem:[%s212 + $0x2c] sm:$0xf] %v575
        %618 = vst [vmem:[%s212 + $0x30] sm:$0xf] %v576
        %619 = vst [vmem:[%s212 + $0x34] sm:$0xf] %v577
        %620 = vst [vmem:[%s212 + $0x38] sm:$0xf] %v578
        %621 = vst [vmem:[%s212 + $0x3c] sm:$0xf] %v579
        %622 = vst [vmem:[%s212 + $0x40] sm:$0xf] %v580
        %623 = vst [vmem:[%s212 + $0x44] sm:$0xf] %v581
        %624 = vst [vmem:[%s212 + $0x48] sm:$0xf] %v582
        %625 = vst [vmem:[%s212 + $0x4c] sm:$0xf] %v583
        %626 = vst [vmem:[%s212 + $0x50] sm:$0xf] %v584
        %627 = vst [vmem:[%s212 + $0x54] sm:$0xf] %v585
        %628 = vst [vmem:[%s212 + $0x58] sm:$0xf] %v586
        %629 = vst [vmem:[%s212 + $0x5c] sm:$0xf] %v587
        %630 = vst [vmem:[%s212 + $0x60] sm:$0xf] %v588
        %631 = vst [vmem:[%s212 + $0x64] sm:$0xf] %v589
        %632 = vst [vmem:[%s212 + $0x68] sm:$0xf] %v590
        %633 = vst [vmem:[%s212 + $0x6c] sm:$0xf] %v591
        %634 = vst [vmem:[%s212 + $0x70] sm:$0xf] %v592
        %635 = vst [vmem:[%s212 + $0x74] sm:$0xf] %v593
        %636 = vst [vmem:[%s212 + $0x78] sm:$0xf] %v594
        %637 = vst [vmem:[%s212 + $0x7c] sm:$0xf] %v595
        %638 = vst [vmem:[%s212 + $0x80] sm:$0xf] %v596
        %639 = vst [vmem:[%s212 + $0x84] sm:$0xf] %v597
        %640 = vst [vmem:[%s212 + $0x88] sm:$0xf] %v598
        %641 = vst [vmem:[%s212 + $0x8c] sm:$0xf] %v599
        %642 = vst [vmem:[%s212 + $0x90] sm:$0xf] %v600
        %643 = vst [vmem:[%s212 + $0x94] sm:$0xf] %v601
        %644 = vst [vmem:[%s212 + $0x98] sm:$0xf] %v602
        %645 = vst [vmem:[%s212 + $0x9c] sm:$0xf] %v603
        %646 = vst [vmem:[%s212 + $0xa0] sm:$0xf] %v604
        %647 = vst [vmem:[%s212 + $0xa4] sm:$0xf] %v605
        %s648 = sand.u32 %s82, 1
        %s649 = scalar_lea.sflag [#allocation4], %s648
        %s650 = sand.u32 %s82, 1
        %s651 = smul.addr %s650, 168
        %s652 = scalar_lea.vmem [#allocation7], %s651
        // Predicated region
        $region37: #{tpu_custom_call.1} parent=27 // pred_check
          %p653 = pneg %p92
        $region38: #{tpu_custom_call.1} parent=27 // pred_check_branch
          %655 = sbr.rel (%p653) target = $region40
        $region39: #{tpu_custom_call.1} parent=27 // pred_region
          %s656 = smul.u32 42, %s22
          %s657 = ssub.s32 300, %s656
          %p658 = scmp.lt.s32.totalorder %s657, 42
          %s659 = scalar_select %p658, %s657, 42
          %s660 = smul.u32 64, %s659
          %s662 = ssub.s32 2688, %s660
          %663 = vsyncadd %s649, %s662
          %p664 = scmp.ne.s32.totalorder 0, %s660
          %s665 = smul.addr %s656, 64
          %s666 = scalar_lea.hbm %s2, %s665
          %s667 = smul.u32 4, %s659
          %s668 = sshll.u32 %s652, 4
          %s669 = int_to_ptr.vmem [resolvable:$true] %s668
          %s670 = sshll.u32 %s667, 4
          %674 = dma.vmem_to_hbm [thread:$0]  (%p664), %s669, %s670, %s666, %s649, 64, 64, 4
        $region40: #{tpu_custom_call.1} parent=27 // pred_fallthru
          _
      $region28: #{tpu_custom_call.1} parent=5 // pred_fallthru
        _
      %p675 = scmp.le.s32.totalorder 2, %s17
      // Predicated region
      $region41: #{tpu_custom_call.1} parent=5 // pred_check
        %p676 = pneg %p675
      $region42: #{tpu_custom_call.1} parent=5 // pred_check_branch
        %678 = sbr.rel (%p676) target = $region44
      $region43: #{tpu_custom_call.1} parent=5 // pred_region
        %s679 = ssub.s32 %s17, 2
        // Predicated region
        $region45: #{tpu_custom_call.1} parent=43 // pred_check
          %p680 = pneg %p98
        $region46: #{tpu_custom_call.1} parent=43 // pred_check_branch
          %682 = sbr.rel (%p680) target = $region48
        $region47: #{tpu_custom_call.1} parent=43 // pred_region
          %s683 = sand.u32 %s83, 1
          %s684 = scalar_lea.sflag [#allocation4], %s683
          %s685 = sand.u32 %s83, 1
          %s686 = smul.addr %s685, 168
          %s687 = scalar_lea.vmem [#allocation7], %s686
          %688 = dma.done %s684, 2688
        $region48: #{tpu_custom_call.1} parent=43 // pred_fallthru
          _
      $region44: #{tpu_custom_call.1} parent=5 // pred_fallthru
        _
    $region6: #{tpu_custom_call.1} parent=1 // loop_footer
      %s21 = sadd.s32 1, %s17
    $region7: #{tpu_custom_call.1} parent=1 // loop_footer_branch
      %16 = sbr.rel target = $region3
    $region8: #{tpu_custom_call.1} parent=1 // loop_exit
      _
    %689 = vsyncpa [#allocation3], 1
    %s690 = scalar_lea.sflag [#allocation3], 1
    %691 = vsyncpa %s690, 1
    %692 = vsyncpa [#allocation6], 1
    %s693 = scalar_lea.sflag [#allocation6], 1
    %694 = vsyncpa %s693, 1
    %695 = vsyncpa [#allocation4], 1
    %s696 = scalar_lea.sflag [#allocation4], 1
    %697 = vsyncpa %s696, 1

</llo_original>
